<compile_context>
chip_gen: v6e
topology: v6e:2x2x1
jax: 0.10.0
libtpu: 0.0.40
codegen_flags: <defaults>
</compile_context>

<pallas_src>
import jax
import jax.numpy as jnp
from jax import lax
from jax.experimental import pallas as pl
from jax.experimental.pallas import tpu as pltpu


def baseline_kernel(x_ref, w_ref, p_ref, out_ref, acc_ref):
    # x_ref   : [1, C, THW]  one image's HW tile, natural NCHW layout (HW in lanes)
    # w_ref   : [C, Cout]    1x1-conv weight with 1/pixel_std folded in
    # p_ref   : [3, Cout]    f32 params: row0 = folded conv bias,
    #                        row1 = BN gamma * (1/HW), row2 = BN beta
    # out_ref : [1, 1, Cout] per-image features (lane-dense row)
    # acc_ref : [1, Cout]    f32 pooled-sum accumulator (VMEM scratch)
    k = pl.program_id(1)

    @pl.when(k == 0)
    def _init():
        acc_ref[...] = jnp.zeros_like(acc_ref)

    x = x_ref[0]          # [C, THW]
    w = w_ref[...]        # [C, Cout]
    # 1x1 conv (preprocess already folded into w/bias): contract the channel dim of
    # both operands -> lane-dense [THW, Cout] tile, f32 accumulation on the MXU.
    h = lax.dot_general(x, w, dimension_numbers=(((0,), (0,)), ((), ())),
                        preferred_element_type=jnp.float32)        # [THW, Cout]
    h = jnp.maximum(h + p_ref[0:1, :], 0.0)                        # bias + ReLU (f32)
    # Global average pool == sum over HW (1/HW folded into gamma); accumulate in f32.
    acc_ref[...] += jnp.sum(h, axis=0, keepdims=True)              # [1, Cout]

    @pl.when(k == pl.num_programs(1) - 1)
    def _finalize():
        gamma = p_ref[1:2, :]
        beta = p_ref[2:3, :]
        out_ref[0] = (acc_ref[...] * gamma + beta).astype(out_ref.dtype)


def baseline_forward(x_nchw, pixel_mean, pixel_std, conv_w, bn_gamma, bn_beta,
                     *, hw_tile=128, compute_dtype=jnp.bfloat16):
    """Eval forward of the Baseline meta-arch.  Returns features [N, Cout]."""
    N, C, H, W = x_nchw.shape
    Cout = conv_w.shape[1]
    HW = H * W
    hw_tile = min(hw_tile, HW)
    assert HW % hw_tile == 0, "HW must be a multiple of the HW tile"

    # Natural NCHW layout, spatial flattened (a free reshape): HW stays in the lane
    # dim, no host-side HBM transpose pass.  Only the dominant x stream is narrowed.
    x3 = x_nchw.reshape(N, C, HW).astype(compute_dtype)

    inv_std = 1.0 / pixel_std.astype(jnp.float32)                         # [C]
    w32 = conv_w.astype(jnp.float32)                                      # [C, Cout]
    # Fold preprocess into the conv:
    #   relu(((x - mean)/std) @ W) == relu(x @ (W * (1/std)[:,None]) + b_eff)
    w_eff = (w32 * inv_std[:, None]).astype(compute_dtype)                # [C, Cout]
    b_eff = -(pixel_mean.astype(jnp.float32) * inv_std) @ w32             # [Cout]
    # Merge bias / (gamma * 1/HW) / beta into one lane-dense param tensor (one DMA).
    params = jnp.stack(
        [b_eff, bn_gamma.astype(jnp.float32) / HW, bn_beta.astype(jnp.float32)],
        axis=0)                                                           # [3, Cout]

    n_hw_tiles = HW // hw_tile

    out = pl.pallas_call(
        baseline_kernel,
        out_shape=jax.ShapeDtypeStruct((N, 1, Cout), jnp.float32),
        grid=(N, n_hw_tiles),
        in_specs=[
            pl.BlockSpec((1, C, hw_tile), lambda n, k: (n, 0, k)),
            pl.BlockSpec((C, Cout), lambda n, k: (0, 0)),
            pl.BlockSpec((3, Cout), lambda n, k: (0, 0)),
        ],
        out_specs=pl.BlockSpec((1, 1, Cout), lambda n, k: (n, 0, 0)),
        scratch_shapes=[pltpu.VMEM((1, Cout), jnp.float32)],
        compiler_params=pltpu.CompilerParams(
            # N is independent -> shard across TensorCores (v7x has 2 per chip);
            # the HW-tile axis is the pooled-sum reduction -> keep it "arbitrary".
            dimension_semantics=("parallel", "arbitrary"),
            # Explicit scoped-VMEM budget (safe on v5e/v6e/v7x); raise per
            # generation and enlarge hw_tile / add a Cout tile at real shapes.
            vmem_limit_bytes=32 * 1024 * 1024,
        ),
    )(x3, w_eff, params)

    return out.reshape(N, Cout)


def reference_forward(x_nchw, pixel_mean, pixel_std, conv_w, bn_gamma, bn_beta):
    # Unfused f32 reference mirroring the original module order:
    # normalize -> 1x1 conv -> ReLU -> global mean pool -> eval-BN affine.
    N, C, H, W = x_nchw.shape
    xn = (x_nchw - pixel_mean.reshape(1, C, 1, 1)) / pixel_std.reshape(1, C, 1, 1)
    x = jnp.transpose(xn, (0, 2, 3, 1)).reshape(N, H * W, C)
    h = jnp.maximum(jnp.einsum("npc,co->npo", x, conv_w), 0.0)
    pooled = jnp.mean(h, axis=1)
    return pooled * bn_gamma.reshape(1, -1) + bn_beta.reshape(1, -1)


if __name__ == "__main__":
    N, C, H, W = 2, 4, 16, 16
    Cout = 32

    key = jax.random.PRNGKey(0)
    k_x, k_w, k_g, k_b, k_rm, k_rv = jax.random.split(key, 6)

    x = jax.random.normal(k_x, (N, C, H, W), dtype=jnp.float32) * 50.0 + 100.0

    # pixel_mean / pixel_std buffers (per-channel, like cfg.MODEL.PIXEL_MEAN/STD)
    pixel_mean = jnp.array([123.675, 116.28, 103.53, 110.0], dtype=jnp.float32)
    pixel_std = jnp.array([58.395, 57.12, 57.375, 57.0], dtype=jnp.float32)

    # synthetic backbone weight: 1x1 conv Cin -> Cout
    conv_w = jax.random.normal(k_w, (C, Cout), dtype=jnp.float32) * 0.1

    # bottleneck BN (eval mode) parameters, folded into affine gamma/beta
    bn_weight = 1.0 + 0.1 * jax.random.normal(k_g, (Cout,), dtype=jnp.float32)
    bn_bias = 0.1 * jax.random.normal(k_b, (Cout,), dtype=jnp.float32)
    running_mean = 0.05 * jax.random.normal(k_rm, (Cout,), dtype=jnp.float32)
    running_var = jnp.abs(1.0 + 0.1 * jax.random.normal(k_rv, (Cout,), dtype=jnp.float32))
    eps = 1e-5
    bn_gamma = bn_weight / jnp.sqrt(running_var + eps)
    bn_beta = bn_bias - running_mean * bn_gamma

    ref = reference_forward(x, pixel_mean, pixel_std, conv_w, bn_gamma, bn_beta)

    # f32 compute path: tight check against the unfused module-order reference.
    feats_f32 = baseline_forward(x, pixel_mean, pixel_std, conv_w, bn_gamma, bn_beta,
                                 compute_dtype=jnp.float32)
    feats_f32 = jax.block_until_ready(feats_f32)
    assert feats_f32.shape == (N, Cout)
    assert jnp.allclose(feats_f32, ref, atol=1e-3, rtol=1e-3), "f32 mismatch vs reference"

    # bf16 matmul path (performance config): tolerance loosened only for the bf16
    # rounding of the x / W operands; accumulation stays f32 in the kernel.
    feats_bf16 = baseline_forward(x, pixel_mean, pixel_std, conv_w, bn_gamma, bn_beta,
                                  compute_dtype=jnp.bfloat16)
    feats_bf16 = jax.block_until_ready(feats_bf16)
    assert feats_bf16.shape == (N, Cout)
    assert jnp.allclose(feats_bf16, ref, atol=5e-2, rtol=5e-2), "bf16 mismatch vs reference"

    print("KERNEL_OK")
</pallas_src>

<mosaic_0001>
module attributes {stable_mosaic.version = 11 : i64} {
  func.func @baseline_kernel(%arg0: i32, %arg1: i32, %arg2: memref<1x4x128xf32, #tpu.memory_space<vmem>>, %arg3: memref<4x32xf32, #tpu.memory_space<vmem>>, %arg4: memref<3x32xf32, #tpu.memory_space<vmem>>, %arg5: memref<1x1x32xf32, #tpu.memory_space<vmem>>, %arg6: memref<1x32xf32, #tpu.memory_space<vmem>>) attributes {dimension_semantics = [#tpu.dimension_semantics<parallel>, #tpu.dimension_semantics<arbitrary>], iteration_bounds = array<i64: 2, 2>, scalar_prefetch = 0 : i64, scratch_operands = 1 : i64, tpu.core_type = #tpu.core_type<tc>, window_params = [{transform_indices = @transform_0, window_bounds = array<i64: 1, 4, 128>}, {pipeline_mode = #tpu.pipeline_mode<synchronous>, transform_indices = @transform_1, window_bounds = array<i64: 4, 32>}, {pipeline_mode = #tpu.pipeline_mode<synchronous>, transform_indices = @transform_2, window_bounds = array<i64: 3, 32>}, {transform_indices = @transform_3, window_bounds = array<i64: 1, 1, 32>}]} {
    %c0_i32 = arith.constant 0 : i32
    %0 = arith.cmpi eq, %arg1, %c0_i32 : i32
    %1 = arith.extui %0 : i1 to i32
    %c0_i32_0 = arith.constant 0 : i32
    %2 = arith.cmpi ne, %1, %c0_i32_0 : i32
    scf.if %2 {
      %cst_14 = arith.constant 0.000000e+00 : f32
      %20 = vector.broadcast %cst_14 : f32 to vector<1x32xf32>
      %c0_15 = arith.constant 0 : index
      %c0_16 = arith.constant 0 : index
      %21 = vector.load %arg6[%c0_15, %c0_16] : memref<1x32xf32, #tpu.memory_space<vmem>>, vector<1x32xf32>
      tpu.vector_store %arg6[%c0_15, %c0_16], %20 {strides = array<i32>} : memref<1x32xf32, #tpu.memory_space<vmem>>, vector<1x32xf32>,
    } else {
    }
    %c0 = arith.constant 0 : index
    %c0_1 = arith.constant 0 : index
    %c0_2 = arith.constant 0 : index
    %3 = vector.load %arg2[%c0, %c0_1, %c0_2] : memref<1x4x128xf32, #tpu.memory_space<vmem>>, vector<1x4x128xf32>
    %4 = vector.shape_cast %3 : vector<1x4x128xf32> to vector<4x128xf32>
    %c0_3 = arith.constant 0 : index
    %c0_4 = arith.constant 0 : index
    %5 = vector.load %arg3[%c0_3, %c0_4] : memref<4x32xf32, #tpu.memory_space<vmem>>, vector<4x32xf32>
    %cst = arith.constant dense<0.000000e+00> : vector<128x32xf32>
    %6 = tpu.matmul %4, %5, %cst {dimension_numbers = #tpu.dot_dimension_numbers<[0], [0], [1], [1], [0, 1, 1, 1], [], []>} : vector<4x128xf32>, vector<4x32xf32>, vector<128x32xf32> -> vector<128x32xf32>
    %c0_5 = arith.constant 0 : index
    %c0_6 = arith.constant 0 : index
    %7 = vector.load %arg4[%c0_5, %c0_6] : memref<3x32xf32, #tpu.memory_space<vmem>>, vector<1x32xf32>
    %8 = vector.broadcast %7 : vector<1x32xf32> to vector<128x32xf32>
    %9 = arith.addf %6, %8 : vector<128x32xf32>
    %cst_7 = arith.constant 0.000000e+00 : f32
    %10 = vector.broadcast %cst_7 : f32 to vector<128x32xf32>
    %11 = arith.maximumf %9, %10 : vector<128x32xf32>
    %c0_8 = arith.constant 0 : index
    %c0_9 = arith.constant 0 : index
    %12 = vector.load %arg6[%c0_8, %c0_9] : memref<1x32xf32, #tpu.memory_space<vmem>>, vector<1x32xf32>
    %cst_10 = arith.constant dense<0.000000e+00> : vector<32xf32>
    %13 = vector.multi_reduction <add>, %11, %cst_10 [0] : vector<128x32xf32> to vector<32xf32>
    %14 = vector.shape_cast %13 : vector<32xf32> to vector<1x32xf32>
    %15 = arith.addf %12, %14 : vector<1x32xf32>
    %c0_11 = arith.constant 0 : index
    %c0_12 = arith.constant 0 : index
    %16 = vector.load %arg6[%c0_11, %c0_12] : memref<1x32xf32, #tpu.memory_space<vmem>>, vector<1x32xf32>
    tpu.vector_store %arg6[%c0_11, %c0_12], %15 {strides = array<i32>} : memref<1x32xf32, #tpu.memory_space<vmem>>, vector<1x32xf32>,
    %c1_i32 = arith.constant 1 : i32
    %17 = arith.cmpi eq, %arg1, %c1_i32 : i32
    %18 = arith.extui %17 : i1 to i32
    %c0_i32_13 = arith.constant 0 : i32
    %19 = arith.cmpi ne, %18, %c0_i32_13 : i32
    scf.if %19 {
      %c1 = arith.constant 1 : index
      %c0_14 = arith.constant 0 : index
      %20 = vector.load %arg4[%c1, %c0_14] : memref<3x32xf32, #tpu.memory_space<vmem>>, vector<1x32xf32>
      %c2 = arith.constant 2 : index
      %c0_15 = arith.constant 0 : index
      %21 = vector.load %arg4[%c2, %c0_15] : memref<3x32xf32, #tpu.memory_space<vmem>>, vector<1x32xf32>
      %c0_16 = arith.constant 0 : index
      %c0_17 = arith.constant 0 : index
      %22 = vector.load %arg6[%c0_16, %c0_17] : memref<1x32xf32, #tpu.memory_space<vmem>>, vector<1x32xf32>
      %23 = arith.mulf %22, %20 : vector<1x32xf32>
      %24 = arith.addf %23, %21 : vector<1x32xf32>
      %c0_18 = arith.constant 0 : index
      %c0_19 = arith.constant 0 : index
      %c0_20 = arith.constant 0 : index
      %25 = vector.load %arg5[%c0_18, %c0_19, %c0_20] : memref<1x1x32xf32, #tpu.memory_space<vmem>>, vector<1x1x32xf32>
      %26 = vector.shape_cast %25 : vector<1x1x32xf32> to vector<1x32xf32>
      %27 = vector.shape_cast %24 : vector<1x32xf32> to vector<1x1x32xf32>
      tpu.vector_store %arg5[%c0_18, %c0_19, %c0_20], %27 {strides = array<i32>} : memref<1x1x32xf32, #tpu.memory_space<vmem>>, vector<1x1x32xf32>,
    } else {
    }
    return
  }
  func.func @transform_0(%arg0: i32, %arg1: i32) -> (i32, i32, i32) {
    %c0_i32 = arith.constant 0 : i32
    %c0_i32_0 = arith.constant 0 : i32
    return %arg0, %c0_i32, %arg1 : i32, i32, i32
  }
  func.func @transform_1(%arg0: i32, %arg1: i32) -> (i32, i32) {
    %c0_i32 = arith.constant 0 : i32
    %c0_i32_0 = arith.constant 0 : i32
    %c0_i32_1 = arith.constant 0 : i32
    return %c0_i32, %c0_i32_0 : i32, i32
  }
  func.func @transform_2(%arg0: i32, %arg1: i32) -> (i32, i32) {
    %c0_i32 = arith.constant 0 : i32
    %c0_i32_0 = arith.constant 0 : i32
    %c0_i32_1 = arith.constant 0 : i32
    return %c0_i32, %c0_i32_0 : i32, i32
  }
  func.func @transform_3(%arg0: i32, %arg1: i32) -> (i32, i32, i32) {
    %c0_i32 = arith.constant 0 : i32
    %c0_i32_0 = arith.constant 0 : i32
    %c0_i32_1 = arith.constant 0 : i32
    return %arg0, %c0_i32, %c0_i32_0 : i32, i32, i32
  }
}

</mosaic_0001>

<llo_original>
// kernel: tpu_custom_call.1
$region0: #{tpu_custom_call.1}
  #allocation0 [shape = 'u32[]', space=smem, size = 0x4, offset = 0x4, fixed_abs, tag = 'smem constant byte address 0x4 - core index']
  #allocation1 [shape = 'u32[144,128]{1,0:T(1,128)}', space=vmem, size = 0x12000, scoped, tag = 'internal scratch']
  #allocation2 [shape = 'f32[1,32]{1,0:T(1,128)}', space=vmem, size = 0x200, scoped, tag = 'scratch operand']
  %s0 = inlined_call_operand.hbm [shape: f32[2,4,256], index: 0, kind: input, shape index: {}]
  %s1 = inlined_call_operand.hbm [shape: f32[4,32], index: 1, kind: input, shape index: {}]
  %s2 = inlined_call_operand.hbm [shape: f32[3,32], index: 2, kind: input, shape index: {}]
  %s3 = inlined_call_operand.hbm [shape: f32[2,1,32], index: 3, kind: output, shape index: {}]
  %s4 = sld [smem:[#allocation0]]
  $region65: #{tpu_custom_call.1} parent=0
    _
  %s6 = ssub.s32 1, %s4
  %s7 = scalar_select 0, %s6, %s4
  $region1: #{tpu_custom_call.1} parent=0
    #allocation3 [shape = 'u8[4096]{0}', space=vmem, size = 0x1000, scoped, tag = 'input window, operand 0']
    #allocation4 [shape = 's32[2]{0}', space=sflag, size = 0x8, scoped, tag = 'scoped memory for tpu_custom_call.1']
    #allocation5 [shape = 's32[2]{0}', space=sflag, size = 0x8, scoped, tag = 'scoped memory for tpu_custom_call.1']
    #allocation6 [shape = 'u8[2048]{0}', space=vmem, size = 0x800, scoped, tag = 'input window, operand 1, single buffered']
    #allocation7 [shape = 's32[1]{0}', space=sflag, size = 0x4, scoped, tag = 'scoped memory for tpu_custom_call.1']
    #allocation8 [shape = 'u8[2048]{0}', space=vmem, size = 0x800, scoped, tag = 'input window, operand 2, single buffered']
    #allocation9 [shape = 'u8[1024]{0}', space=vmem, size = 0x400, scoped, tag = 'output window, operand 0']
    %8 = vsyncpa [#allocation4], 0
    %s9 = scalar_lea.sflag [#allocation4], 1
    %10 = vsyncpa %s9, 0
    %11 = vsyncpa [#allocation7], 0
    %12 = vsyncpa [#allocation5], 0
    %s13 = scalar_lea.sflag [#allocation5], 1
    %14 = vsyncpa %s13, 0
    loop: start=0, step=1, limit=6
    $region2: #{tpu_custom_call.1} parent=1 // loop_pre_header
      _
    $region3: #{tpu_custom_call.1} parent=1 // loop_header
      %s16 = sphi 0, %s20
      %p17 = scmp.ge.s32.totalorder %s16, 6
      %s23 = sphi 0, %s35
      %s24 = sphi 0, %s31
      %s25 = sphi 0, %s23
      %s26 = sphi 0, %s24
      %s27 = sphi 0, %s25
      %s28 = sphi 0, %s26
      %s40 = sphi 0, %s42
      %s43 = sphi 0, %s40
      %s44 = sphi 0, %s43
      %s60 = sphi 0, %s44
      %s64 = sphi 0, %s64
      %s66 = sphi 0, %s64
      %s67 = sphi 0, %s66
      %s81 = sphi 0, %s67
      %s85 = sphi 0, %s85
      %s87 = sphi 0, %s85
      %s88 = sphi 0, %s87
      %s102 = sphi 0, %s88
      %s108 = sphi 0, %s110
      %s111 = sphi 0, %s108
      %s112 = sphi 0, %s111
      %s128 = sphi 0, %s112
    $region4: #{tpu_custom_call.1} parent=1 // loop_header_branch
      %19 = sbr.rel (%p17) target = $region8
    $region5: #{tpu_custom_call.1} parent=1 // loop_body
      %s21 = ssub.s32 %s16, 1
      %s22 = ssub.s32 %s16, 2
      %s29 = sadd.s32 1, %s24
      %p30 = scmp.ge.s32.totalorder %s29, 2
      %s31 = scalar_select %p30, 0, %s29
      %s32 = sadd.s32 1, %s23
      %s33 = scalar_select %p30, %s32, %s23
      %p34 = scmp.ge.s32.totalorder %s33, 2
      %s35 = scalar_select %p34, 0, %s33
      %s36 = ssub.s32 %s23, %s35
      %s37 = ssub.s32 %s24, %s31
      %s38 = sor.u32 %s36, %s37
      %p39 = scmp.eq.s32.totalorder %s38, 0
      %s41 = sadd.s32 %s40, 1
      %s42 = scalar_select %p39, %s40, %s41
      %p45 = pneg %p39
      %p46 = scmp.eq.s32.totalorder %s16, 3
      %p47 = por %p45, %p46
      %p48 = scmp.ne.s32.totalorder %s40, %s43
      %p49 = scmp.eq.s32.totalorder %s16, 0
      %p50 = por %p48, %p49
      %p51 = scmp.ne.s32.totalorder %s40, %s43
      %p52 = scmp.eq.s32.totalorder %s21, 3
      %p53 = por %p51, %p52
      %p54 = scmp.ne.s32.totalorder %s43, %s44
      %p55 = scmp.eq.s32.totalorder %s21, 0
      %p56 = por %p54, %p55
      %p57 = scmp.ne.s32.totalorder %s43, %s44
      %p58 = scmp.eq.s32.totalorder %s22, 3
      %p59 = por %p57, %p58
      %p61 = scmp.ne.s32.totalorder %s44, %s60
      %p62 = scmp.eq.s32.totalorder %s22, 0
      %p63 = por %p61, %p62
      %s65 = sadd.s32 %s64, 1
      %p68 = scmp.eq.s32.totalorder %s16, 3
      %p69 = scmp.ne.s32.totalorder %s64, %s66
      %p70 = scmp.eq.s32.totalorder %s16, 0
      %p71 = por %p69, %p70
      %p72 = scmp.ne.s32.totalorder %s64, %s66
      %p73 = scmp.eq.s32.totalorder %s21, 3
      %p74 = por %p72, %p73
      %p75 = scmp.ne.s32.totalorder %s66, %s67
      %p76 = scmp.eq.s32.totalorder %s21, 0
      %p77 = por %p75, %p76
      %p78 = scmp.ne.s32.totalorder %s66, %s67
      %p79 = scmp.eq.s32.totalorder %s22, 3
      %p80 = por %p78, %p79
      %p82 = scmp.ne.s32.totalorder %s67, %s81
      %p83 = scmp.eq.s32.totalorder %s22, 0
      %p84 = por %p82, %p83
      %s86 = sadd.s32 %s85, 1
      %p89 = scmp.eq.s32.totalorder %s16, 3
      %p90 = scmp.ne.s32.totalorder %s85, %s87
      %p91 = scmp.eq.s32.totalorder %s16, 0
      %p92 = por %p90, %p91
      %p93 = scmp.ne.s32.totalorder %s85, %s87
      %p94 = scmp.eq.s32.totalorder %s21, 3
      %p95 = por %p93, %p94
      %p96 = scmp.ne.s32.totalorder %s87, %s88
      %p97 = scmp.eq.s32.totalorder %s21, 0
      %p98 = por %p96, %p97
      %p99 = scmp.ne.s32.totalorder %s87, %s88
      %p100 = scmp.eq.s32.totalorder %s22, 3
      %p101 = por %p99, %p100
      %p103 = scmp.ne.s32.totalorder %s88, %s102
      %p104 = scmp.eq.s32.totalorder %s22, 0
      %p105 = por %p103, %p104
      %s106 = ssub.s32 %s23, %s35
      %p107 = scmp.eq.s32.totalorder %s106, 0
      %s109 = sadd.s32 %s108, 1
      %s110 = scalar_select %p107, %s108, %s109
      %p113 = pneg %p107
      %p114 = scmp.eq.s32.totalorder %s16, 3
      %p115 = por %p113, %p114
      %p116 = scmp.ne.s32.totalorder %s108, %s111
      %p117 = scmp.eq.s32.totalorder %s16, 0
      %p118 = por %p116, %p117
      %p119 = scmp.ne.s32.totalorder %s108, %s111
      %p120 = scmp.eq.s32.totalorder %s21, 3
      %p121 = por %p119, %p120
      %p122 = scmp.ne.s32.totalorder %s111, %s112
      %p123 = scmp.eq.s32.totalorder %s21, 0
      %p124 = por %p122, %p123
      %p125 = scmp.ne.s32.totalorder %s111, %s112
      %p126 = scmp.eq.s32.totalorder %s22, 3
      %p127 = por %p125, %p126
      %p129 = scmp.ne.s32.totalorder %s112, %s128
      %p130 = scmp.eq.s32.totalorder %s22, 0
      %p131 = por %p129, %p130
      %p132 = scmp.le.s32.totalorder 1, %s16
      %p133 = scmp.lt.s32.totalorder %s16, 5
      %p134 = pnand %p132, %p133
      %p135 = pneg %p134
      // Predicated region
      $region9: #{tpu_custom_call.1} parent=5 // pred_check
        _
      $region10: #{tpu_custom_call.1} parent=5 // pred_check_branch
        %137 = sbr.rel (%p134) target = $region12
      $region11: #{tpu_custom_call.1} parent=5 // pred_region
        %s138 = ssub.s32 %s16, 1
        // Predicated region
        $region13: #{tpu_custom_call.1} parent=11 // pred_check
          %p139 = pneg %p77
        $region14: #{tpu_custom_call.1} parent=11 // pred_check_branch
          %141 = sbr.rel (%p139) target = $region16
        $region15: #{tpu_custom_call.1} parent=11 // pred_region
          %s143 = ssub.s32 64, 64
          %144 = vsyncadd [#allocation7], %s143
          %s146 = sshll.u32 [#allocation6], 4
          %s147 = int_to_ptr.vmem [resolvable:$true] %s146
          %149 = dma.hbm_to_vmem [thread:$0]  %s1, 64, %s147, [#allocation7]
        $region16: #{tpu_custom_call.1} parent=11 // pred_fallthru
          _
        // Predicated region
        $region17: #{tpu_custom_call.1} parent=11 // pred_check
          %p150 = pneg %p98
        $region18: #{tpu_custom_call.1} parent=11 // pred_check_branch
          %152 = sbr.rel (%p150) target = $region20
        $region19: #{tpu_custom_call.1} parent=11 // pred_region
          %s154 = ssub.s32 64, 64
          %155 = vsyncadd [#allocation7], %s154
          %s157 = sshll.u32 [#allocation8], 4
          %s158 = int_to_ptr.vmem [resolvable:$true] %s157
          %160 = dma.hbm_to_vmem [thread:$0]  %s2, 64, %s158, [#allocation7]
        $region20: #{tpu_custom_call.1} parent=11 // pred_fallthru
          _
      $region12: #{tpu_custom_call.1} parent=5 // pred_fallthru
        _
      %p161 = scmp.lt.s32.totalorder %s16, 4
      // Predicated region
      $region21: #{tpu_custom_call.1} parent=5 // pred_check
        %p162 = pneg %p161
      $region22: #{tpu_custom_call.1} parent=5 // pred_check_branch
        %164 = sbr.rel (%p162) target = $region24
      $region23: #{tpu_custom_call.1} parent=5 // pred_region
        // Predicated region
        $region25: #{tpu_custom_call.1} parent=23 // pred_check
          %p165 = pneg %p50
        $region26: #{tpu_custom_call.1} parent=23 // pred_check_branch
          %167 = sbr.rel (%p165) target = $region28
        $region27: #{tpu_custom_call.1} parent=23 // pred_region
          %s168 = sand.u32 %s40, 1
          %s169 = scalar_lea.sflag [#allocation4], %s168
          %s170 = sand.u32 %s40, 1
          %s171 = smul.addr %s170, 4
          %s172 = scalar_lea.vmem [#allocation3], %s171
          %s174 = ssub.s32 64, 64
          %175 = vsyncadd %s169, %s174
          %s176 = smul.addr %s23, 2
          %s177 = sadd.s32 %s24, %s176
          %s178 = smul.addr %s177, 64
          %s179 = scalar_lea.hbm %s0, %s178
          %s181 = sshll.u32 %s172, 4
          %s182 = int_to_ptr.vmem [resolvable:$true] %s181
          %184 = dma.hbm_to_vmem [thread:$0]  %s179, 64, %s182, %s169
        $region28: #{tpu_custom_call.1} parent=23 // pred_fallthru
          _
      $region24: #{tpu_custom_call.1} parent=5 // pred_fallthru
        _
      %p185 = scmp.le.s32.totalorder 1, %s16
      %p186 = scmp.lt.s32.totalorder %s16, 5
      %p187 = pnand %p185, %p186
      %p188 = pneg %p187
      // Predicated region
      $region29: #{tpu_custom_call.1} parent=5 // pred_check
        _
      $region30: #{tpu_custom_call.1} parent=5 // pred_check_branch
        %190 = sbr.rel (%p187) target = $region32
      $region31: #{tpu_custom_call.1} parent=5 // pred_region
        %s191 = ssub.s32 %s16, 1
        %s192 = sand.u32 %s43, 1
        %s193 = scalar_lea.sflag [#allocation4], %s192
        %s194 = sand.u32 %s43, 1
        %s195 = smul.addr %s194, 4
        %s196 = scalar_lea.vmem [#allocation3], %s195
        // Predicated region
        $region33: #{tpu_custom_call.1} parent=31 // pred_check
          %p197 = pneg %p56
        $region34: #{tpu_custom_call.1} parent=31 // pred_check_branch
          %199 = sbr.rel (%p197) target = $region36
        $region35: #{tpu_custom_call.1} parent=31 // pred_region
          %200 = dma.done %s193, 64
        $region36: #{tpu_custom_call.1} parent=31 // pred_fallthru
          _
        // Predicated region
        $region37: #{tpu_custom_call.1} parent=31 // pred_check
          %p201 = pneg %p77
        $region38: #{tpu_custom_call.1} parent=31 // pred_check_branch
          %203 = sbr.rel (%p201) target = $region40
        $region39: #{tpu_custom_call.1} parent=31 // pred_region
          %204 = dma.done [#allocation7], 64
        $region40: #{tpu_custom_call.1} parent=31 // pred_fallthru
          _
        // Predicated region
        $region41: #{tpu_custom_call.1} parent=31 // pred_check
          %p205 = pneg %p98
        $region42: #{tpu_custom_call.1} parent=31 // pred_check_branch
          %207 = sbr.rel (%p205) target = $region44
        $region43: #{tpu_custom_call.1} parent=31 // pred_region
          %208 = dma.done [#allocation7], 64
        $region44: #{tpu_custom_call.1} parent=31 // pred_fallthru
          _
        %s209 = sand.u32 %s43, 1
        %s210 = scalar_lea.sflag [#allocation4], %s209
        %s211 = sand.u32 %s43, 1
        %s212 = smul.addr %s211, 4
        %s213 = scalar_lea.vmem [#allocation3], %s212
        %p214 = pneg %p56
        %p215 = pneg %p53
        %p216 = pneg %p77
        %p217 = pneg %p74
        %p218 = pneg %p98
        %p219 = pneg %p95
        %p220 = pneg %p124
        %p221 = pneg %p121
        %s222 = sand.u32 %s111, 1
        %s223 = scalar_lea.sflag [#allocation5], %s222
        %s224 = sand.u32 %s111, 1
        %s225 = scalar_lea.vmem [#allocation9], %s224
        %p226 = scmp.eq.s32.totalorder %s26, 0
        // Predicated region
        $region45: #{tpu_custom_call.1} parent=31 // pred_check
          %p227 = pneg %p226
        $region46: #{tpu_custom_call.1} parent=31 // pred_check_branch
          %229 = sbr.rel (%p227) target = $region48
        $region47: #{tpu_custom_call.1} parent=31 // pred_region
          %vm230 = vcmask 253952
          %231 = vst.msk [vmem:[#allocation2] sm:$0x1] %vm230, 0.0
        $region48: #{tpu_custom_call.1} parent=31 // pred_fallthru
          _
        %v232 = vld [vmem:[%s196] sm:$0xf]
        %v233 = vld [vmem:[#allocation6] sm:$0xf]
        %v234 = vld [vmem:[#allocation8] sm:$0x1]
        %v235 = vlaneseq
        %v236 = vshrl.u32 %v235, 7
        %v237 = vsub.s32 0, %v236
        %v238 = vrot.slane %v234, %v237
        %239 = vxpose.xlu0.b32.start [1/16] %v232, 128
        %240 = vxpose.xlu0.b32.cont [2/16] 0.0, 128
        %241 = vxpose.xlu0.b32.cont [3/16] 0.0, 128
        %242 = vxpose.xlu0.b32.cont [4/16] 0.0, 128
        %243 = vxpose.xlu0.b32.cont [5/16] 0.0, 128
        %244 = vxpose.xlu0.b32.cont [6/16] 0.0, 128
        %245 = vxpose.xlu0.b32.cont [7/16] 0.0, 128
        %246 = vxpose.xlu0.b32.cont [8/16] 0.0, 128
        %247 = vxpose.xlu0.b32.cont [9/16] 0.0, 128
        %248 = vxpose.xlu0.b32.cont [10/16] 0.0, 128
        %249 = vxpose.xlu0.b32.cont [11/16] 0.0, 128
        %250 = vxpose.xlu0.b32.cont [12/16] 0.0, 128
        %251 = vxpose.xlu0.b32.cont [13/16] 0.0, 128
        %252 = vxpose.xlu0.b32.cont [14/16] 0.0, 128
        %253 = vxpose.xlu0.b32.cont [15/16] 0.0, 128
        %254 = vxpose.xlu0.b32.end [16/16] 0.0, 128
        %v255 = vpop.trf.xlu0
        %v256 = vpop.trf.xlu0
        %v257 = vpop.trf.xlu0
        %v258 = vpop.trf.xlu0
        %v259 = vpop.trf.xlu0
        %v260 = vpop.trf.xlu0
        %v261 = vpop.trf.xlu0
        %v262 = vpop.trf.xlu0
        %v263 = vpop.trf.xlu0
        %v264 = vpop.trf.xlu0
        %v265 = vpop.trf.xlu0
        %v266 = vpop.trf.xlu0
        %v267 = vpop.trf.xlu0
        %v268 = vpop.trf.xlu0
        %v269 = vpop.trf.xlu0
        %v270 = vpop.trf.xlu0
        %vm271 = vcmask 31744
        %v273 = vsel %vm271, %v255, 0
        %v276 = vsel %vm271, %v256, 0
        %v279 = vsel %vm271, %v257, 0
        %v282 = vsel %vm271, %v258, 0
        %v285 = vsel %vm271, %v259, 0
        %v288 = vsel %vm271, %v260, 0
        %v291 = vsel %vm271, %v261, 0
        %v294 = vsel %vm271, %v262, 0
        %v297 = vsel %vm271, %v263, 0
        %v300 = vsel %vm271, %v264, 0
        %v303 = vsel %vm271, %v265, 0
        %v306 = vsel %vm271, %v266, 0
        %v309 = vsel %vm271, %v267, 0
        %v312 = vsel %vm271, %v268, 0
        %v315 = vsel %vm271, %v269, 0
        %v318 = vsel %vm271, %v270, 0
        %vm320 = vcmask 1043456
        %v322 = vsel %vm320, %v233, 0
        %324 = vmatprep.subr.mxu0 0.0
        %325 = vmatpush1.msra.mxu0 0.0
        %326 = vmatprep.subr.mxu0 0.0
        %327 = vmatpush1.msra.mxu0 0.0
        %328 = vmatprep.subr.mxu0 0.0
        %329 = vmatpush1.msra.mxu0 0.0
        %330 = vmatprep.subr.mxu0 0.0
        %331 = vmatpush1.msra.mxu0 0.0
        %332 = vmatprep.subr.mxu0 0.0
        %333 = vmatpush1.msra.mxu0 0.0
        %334 = vmatprep.subr.mxu0 0.0
        %335 = vmatpush1.msra.mxu0 0.0
        %336 = vmatprep.subr.mxu0 0.0
        %337 = vmatpush1.msra.mxu0 0.0
        %338 = vmatprep.subr.mxu0 0.0
        %339 = vmatpush1.msra.mxu0 0.0
        %340 = vmatprep.subr.mxu0 0.0
        %341 = vmatpush1.msra.mxu0 0.0
        %342 = vmatprep.subr.mxu0 0.0
        %343 = vmatpush1.msra.mxu0 0.0
        %344 = vmatprep.subr.mxu0 0.0
        %345 = vmatpush1.msra.mxu0 0.0
        %346 = vmatprep.subr.mxu0 0.0
        %347 = vmatpush1.msra.mxu0 0.0
        %348 = vmatprep.subr.mxu0 0.0
        %349 = vmatpush1.msra.mxu0 0.0
        %350 = vmatprep.subr.mxu0 0.0
        %351 = vmatpush1.msra.mxu0 0.0
        %352 = vmatprep.subr.mxu0 0.0
        %353 = vmatpush1.msra.mxu0 0.0
        %354 = vmatprep.subr.mxu0 0.0
        %355 = vmatpush1.msra.mxu0 %v322
        %356 = vmatprep.subr.mxu0 0.0
        %357 = vmatpush2.msra.mxu0 0.0
        %358 = vmatprep.subr.mxu0 0.0
        %359 = vmatpush2.msra.mxu0 0.0
        %360 = vmatprep.subr.mxu0 0.0
        %361 = vmatpush2.msra.mxu0 0.0
        %362 = vmatprep.subr.mxu0 0.0
        %363 = vmatpush2.msra.mxu0 0.0
        %364 = vmatprep.subr.mxu0 0.0
        %365 = vmatpush2.msra.mxu0 0.0
        %366 = vmatprep.subr.mxu0 0.0
        %367 = vmatpush2.msra.mxu0 0.0
        %368 = vmatprep.subr.mxu0 0.0
        %369 = vmatpush2.msra.mxu0 0.0
        %370 = vmatprep.subr.mxu0 0.0
        %371 = vmatpush2.msra.mxu0 0.0
        %372 = vmatprep.subr.mxu0 0.0
        %373 = vmatpush2.msra.mxu0 0.0
        %374 = vmatprep.subr.mxu0 0.0
        %375 = vmatpush2.msra.mxu0 0.0
        %376 = vmatprep.subr.mxu0 0.0
        %377 = vmatpush2.msra.mxu0 0.0
        %378 = vmatprep.subr.mxu0 0.0
        %379 = vmatpush2.msra.mxu0 0.0
        %380 = vmatprep.subr.mxu0 0.0
        %381 = vmatpush2.msra.mxu0 0.0
        %382 = vmatprep.subr.mxu0 0.0
        %383 = vmatpush2.msra.mxu0 0.0
        %384 = vmatprep.subr.mxu0 0.0
        %385 = vmatpush2.msra.mxu0 0.0
        %386 = vmatprep.subr.mxu0 0.0
        %387 = vmatpush2.msra.mxu0 0.0
        %388 = vmatprep.mubr.f32.mxu0 0.0
        %389 = vmatmul.mubr.f32.gmra.mxu0 %v273
        %v390 = vpop.f32.mrf.mxu0
        %v391 = vadd.f32 %v238, %v390
        %v392 = vpop.f32.mrf.mxu0
        %393 = vmatprep.mubr.f32.mxu0 0.0
        %394 = vmatmul.mubr.f32.gmra.mxu0 %v276
        %v395 = vpop.f32.mrf.mxu0
        %v396 = vadd.f32 %v238, %v395
        %v397 = vpop.f32.mrf.mxu0
        %398 = vmatprep.mubr.f32.mxu0 0.0
        %399 = vmatmul.mubr.f32.gmra.mxu0 %v279
        %v400 = vpop.f32.mrf.mxu0
        %v401 = vadd.f32 %v238, %v400
        %v402 = vpop.f32.mrf.mxu0
        %403 = vmatprep.mubr.f32.mxu0 0.0
        %404 = vmatmul.mubr.f32.gmra.mxu0 %v282
        %v405 = vpop.f32.mrf.mxu0
        %v406 = vadd.f32 %v238, %v405
        %v407 = vpop.f32.mrf.mxu0
        %408 = vmatprep.mubr.f32.mxu0 0.0
        %409 = vmatmul.mubr.f32.gmra.mxu0 %v285
        %v410 = vpop.f32.mrf.mxu0
        %v411 = vadd.f32 %v238, %v410
        %v412 = vpop.f32.mrf.mxu0
        %413 = vmatprep.mubr.f32.mxu0 0.0
        %414 = vmatmul.mubr.f32.gmra.mxu0 %v288
        %v415 = vpop.f32.mrf.mxu0
        %v416 = vadd.f32 %v238, %v415
        %v417 = vpop.f32.mrf.mxu0
        %418 = vmatprep.mubr.f32.mxu0 0.0
        %419 = vmatmul.mubr.f32.gmra.mxu0 %v291
        %v420 = vpop.f32.mrf.mxu0
        %v421 = vadd.f32 %v238, %v420
        %v422 = vpop.f32.mrf.mxu0
        %423 = vmatprep.mubr.f32.mxu0 0.0
        %424 = vmatmul.mubr.f32.gmra.mxu0 %v294
        %v425 = vpop.f32.mrf.mxu0
        %v426 = vadd.f32 %v238, %v425
        %v427 = vpop.f32.mrf.mxu0
        %428 = vmatprep.mubr.f32.mxu0 0.0
        %429 = vmatmul.mubr.f32.gmra.mxu0 %v297
        %v430 = vpop.f32.mrf.mxu0
        %v431 = vadd.f32 %v238, %v430
        %v432 = vpop.f32.mrf.mxu0
        %433 = vmatprep.mubr.f32.mxu0 0.0
        %434 = vmatmul.mubr.f32.gmra.mxu0 %v300
        %v435 = vpop.f32.mrf.mxu0
        %v436 = vadd.f32 %v238, %v435
        %v437 = vpop.f32.mrf.mxu0
        %438 = vmatprep.mubr.f32.mxu0 0.0
        %439 = vmatmul.mubr.f32.gmra.mxu0 %v303
        %v440 = vpop.f32.mrf.mxu0
        %v441 = vadd.f32 %v238, %v440
        %v442 = vpop.f32.mrf.mxu0
        %443 = vmatprep.mubr.f32.mxu0 0.0
        %444 = vmatmul.mubr.f32.gmra.mxu0 %v306
        %v445 = vpop.f32.mrf.mxu0
        %v446 = vadd.f32 %v238, %v445
        %v447 = vpop.f32.mrf.mxu0
        %448 = vmatprep.mubr.f32.mxu0 0.0
        %449 = vmatmul.mubr.f32.gmra.mxu0 %v309
        %v450 = vpop.f32.mrf.mxu0
        %v451 = vadd.f32 %v238, %v450
        %v452 = vpop.f32.mrf.mxu0
        %453 = vmatprep.mubr.f32.mxu0 0.0
        %454 = vmatmul.mubr.f32.gmra.mxu0 %v312
        %v455 = vpop.f32.mrf.mxu0
        %v456 = vadd.f32 %v238, %v455
        %v457 = vpop.f32.mrf.mxu0
        %458 = vmatprep.mubr.f32.mxu0 0.0
        %459 = vmatmul.mubr.f32.gmra.mxu0 %v315
        %v460 = vpop.f32.mrf.mxu0
        %v461 = vadd.f32 %v238, %v460
        %v462 = vpop.f32.mrf.mxu0
        %463 = vmatprep.mubr.f32.mxu0 0.0
        %464 = vmatmul.mubr.f32.gmra.mxu0 %v318
        %v465 = vpop.f32.mrf.mxu0
        %v466 = vadd.f32 %v238, %v465
        %v467 = vpop.f32.mrf.mxu0
        %468 = vdwg.mxu0
        %v469 = vmax.f32 %v391, 0.0
        %v470 = vmax.f32 %v396, 0.0
        %v471 = vmax.f32 %v401, 0.0
        %v472 = vmax.f32 %v406, 0.0
        %v473 = vmax.f32 %v411, 0.0
        %v474 = vmax.f32 %v416, 0.0
        %v475 = vmax.f32 %v421, 0.0
        %v476 = vmax.f32 %v426, 0.0
        %v477 = vmax.f32 %v431, 0.0
        %v478 = vmax.f32 %v436, 0.0
        %v479 = vmax.f32 %v441, 0.0
        %v480 = vmax.f32 %v446, 0.0
        %v481 = vmax.f32 %v451, 0.0
        %v482 = vmax.f32 %v456, 0.0
        %v483 = vmax.f32 %v461, 0.0
        %v484 = vmax.f32 %v466, 0.0
        %v485 = vld [vmem:[#allocation2] sm:$0x1]
        %vm486 = vcmask 261120
        %v487 = vsel %vm486, %v469, 0.0
        %v488 = vsel %vm486, %v470, 0.0
        %v489 = vadd.f32 %v487, %v488
        %v490 = vsel %vm486, %v471, 0.0
        %v491 = vadd.f32 %v489, %v490
        %v492 = vsel %vm486, %v472, 0.0
        %v493 = vadd.f32 %v491, %v492
        %v494 = vsel %vm486, %v473, 0.0
        %v495 = vadd.f32 %v493, %v494
        %v496 = vsel %vm486, %v474, 0.0
        %v497 = vadd.f32 %v495, %v496
        %v498 = vsel %vm486, %v475, 0.0
        %v499 = vadd.f32 %v497, %v498
        %v500 = vsel %vm486, %v476, 0.0
        %v501 = vadd.f32 %v499, %v500
        %v502 = vsel %vm486, %v477, 0.0
        %v503 = vadd.f32 %v501, %v502
        %v504 = vsel %vm486, %v478, 0.0
        %v505 = vadd.f32 %v503, %v504
        %v506 = vsel %vm486, %v479, 0.0
        %v507 = vadd.f32 %v505, %v506
        %v508 = vsel %vm486, %v480, 0.0
        %v509 = vadd.f32 %v507, %v508
        %v510 = vsel %vm486, %v481, 0.0
        %v511 = vadd.f32 %v509, %v510
        %v512 = vsel %vm486, %v482, 0.0
        %v513 = vadd.f32 %v511, %v512
        %v514 = vsel %vm486, %v483, 0.0
        %v515 = vadd.f32 %v513, %v514
        %v516 = vsel %vm486, %v484, 0.0
        %v517 = vadd.f32 %v515, %v516
        %v518 = vrot.slane %v517, 4
        %v519 = vadd.f32 %v517, %v518
        %v520 = vrot.slane %v519, 2
        %v521 = vadd.f32 %v519, %v520
        %v522 = vrot.slane %v521, 1
        %v523 = vadd.f32 %v521, %v522
        %v524 = vadd.f32 %v485, %v523
        %vm525 = vcmask 253952
        %526 = vst.msk [vmem:[#allocation2] sm:$0x1] %vm525, %v524
        %p527 = scmp.eq.s32.totalorder %s26, 1
        // Predicated region
        $region49: #{tpu_custom_call.1} parent=31 // pred_check
          %p528 = pneg %p527
        $region50: #{tpu_custom_call.1} parent=31 // pred_check_branch
          %530 = sbr.rel (%p528) target = $region52
        $region51: #{tpu_custom_call.1} parent=31 // pred_region
          %v531 = vld [vmem:[#allocation8 + $0x1] sm:$0x1]
          %v532 = vld [vmem:[#allocation8 + $0x2] sm:$0x1]
          %v533 = vld [vmem:[#allocation2] sm:$0x1]
          %v534 = vmul.f32 %v533, %v531
          %v535 = vadd.f32 %v534, %v532
          %536 = vst.msk [vmem:[%s225] sm:$0x1] %vm525, %v535
        $region52: #{tpu_custom_call.1} parent=31 // pred_fallthru
          _
        %s537 = sand.u32 %s111, 1
        %s538 = scalar_lea.sflag [#allocation5], %s537
        %s539 = sand.u32 %s111, 1
        %s540 = scalar_lea.vmem [#allocation9], %s539
        // Predicated region
        $region53: #{tpu_custom_call.1} parent=31 // pred_check
          %p541 = pneg %p121
        $region54: #{tpu_custom_call.1} parent=31 // pred_check_branch
          %543 = sbr.rel (%p541) target = $region56
        $region55: #{tpu_custom_call.1} parent=31 // pred_region
          %s545 = ssub.s32 16, 16
          %546 = vsyncadd %s538, %s545
          %s547 = smul.addr %s25, 16
          %s548 = scalar_lea.hbm %s3, %s547
          %s550 = sshll.u32 %s540, 4
          %s551 = int_to_ptr.vmem [resolvable:$true] %s550
          %553 = dma.vmem_to_hbm [thread:$0]  %s551, 16, %s548, %s538
        $region56: #{tpu_custom_call.1} parent=31 // pred_fallthru
          _
      $region32: #{tpu_custom_call.1} parent=5 // pred_fallthru
        _
      %p554 = scmp.le.s32.totalorder 2, %s16
      // Predicated region
      $region57: #{tpu_custom_call.1} parent=5 // pred_check
        %p555 = pneg %p554
      $region58: #{tpu_custom_call.1} parent=5 // pred_check_branch
        %557 = sbr.rel (%p555) target = $region60
      $region59: #{tpu_custom_call.1} parent=5 // pred_region
        %s558 = ssub.s32 %s16, 2
        // Predicated region
        $region61: #{tpu_custom_call.1} parent=59 // pred_check
          %p559 = pneg %p127
        $region62: #{tpu_custom_call.1} parent=59 // pred_check_branch
          %561 = sbr.rel (%p559) target = $region64
        $region63: #{tpu_custom_call.1} parent=59 // pred_region
          %s562 = sand.u32 %s112, 1
          %s563 = scalar_lea.sflag [#allocation5], %s562
          %s564 = sand.u32 %s112, 1
          %s565 = scalar_lea.vmem [#allocation9], %s564
          %566 = dma.done %s563, 16
        $region64: #{tpu_custom_call.1} parent=59 // pred_fallthru
          _
      $region60: #{tpu_custom_call.1} parent=5 // pred_fallthru
        _
    $region6: #{tpu_custom_call.1} parent=1 // loop_footer
      %s20 = sadd.s32 1, %s16
    $region7: #{tpu_custom_call.1} parent=1 // loop_footer_branch
      %15 = sbr.rel target = $region3
    $region8: #{tpu_custom_call.1} parent=1 // loop_exit
      _
    %567 = vsyncpa [#allocation4], 1
    %s568 = scalar_lea.sflag [#allocation4], 1
    %569 = vsyncpa %s568, 1
    %570 = vsyncpa [#allocation7], 1
    %571 = vsyncpa [#allocation5], 1
    %s572 = scalar_lea.sflag [#allocation5], 1
    %573 = vsyncpa %s572, 1

</llo_original>
